<compile_context>
chip_gen: v5e
topology: v5e:2x2
jax: 0.10.0
libtpu: 0.0.40
codegen_flags: <defaults>
</compile_context>

<pallas_src>
import jax
import jax.numpy as jnp
from jax.experimental import pallas as pl
from jax.experimental.pallas import tpu as pltpu

N, IN, OUT = 4, 4, 3
STACK = 3  # torch.stack((y, y, y), dim=2)


def _linear_kernel(x_ref, wb_ref, y_ref):
    """y = x @ W^T + b, with W^T and b packed into one (IN+1, OUT) buffer."""
    x = x_ref[...]                         # (N, IN)   f32, one vreg
    w = wb_ref[0:IN, :]                    # (IN, OUT) f32  (pre-transposed W)
    b = wb_ref[IN:IN + 1, :]               # (1, OUT)  f32  (bias row)
    y = jnp.dot(x, w, preferred_element_type=jnp.float32) + b
    y_ref[...] = y.astype(y_ref.dtype)


def init_params(w, b):
    """One-time, off-hot-path param prep: pack [W^T ; b] -> (IN+1, OUT)."""
    return jnp.concatenate([w.T, b.reshape(1, OUT)], axis=0)   # (IN+1, OUT)


# Honest advisory cost: every f32 operand moves >= one (8,128) tile via DMA.
_TILE_BYTES = 8 * 128 * 4
_BYTES = 3 * _TILE_BYTES                        # x, wb, y  -> ~12 KiB
_FLOPS = 2 * N * IN * OUT + N * OUT             # MACs + bias add


@jax.jit
def model_forward(x, wb):
    """x: (N, IN) f32; wb: (IN+1, OUT) f32 packed [W^T ; b]."""
    y = pl.pallas_call(
        _linear_kernel,
        out_shape=jax.ShapeDtypeStruct((N, OUT), jnp.float32),
        in_specs=[
            pl.BlockSpec(memory_space=pltpu.MemorySpace.VMEM),
            pl.BlockSpec(memory_space=pltpu.MemorySpace.VMEM),
        ],
        out_specs=pl.BlockSpec(memory_space=pltpu.MemorySpace.VMEM),
        cost_estimate=pl.CostEstimate(
            flops=_FLOPS, transcendentals=0, bytes_accessed=_BYTES),
    )(x, wb)
    # stack((y, y, y), dim=2) then transpose(1, 2) == broadcast of y along a
    # new middle axis of size 3.  Pure layout; fuses into the consumer in XLA.
    return jnp.broadcast_to(y[:, None, :], (N, STACK, OUT))


if __name__ == "__main__":
    key = jax.random.PRNGKey(0)
    kx, kw, kb = jax.random.split(key, 3)

    # Deterministic inputs/params (shapes from nn.Linear(4, 3) and x=(4, 4)).
    x = jax.random.normal(kx, (N, IN), dtype=jnp.float32)
    w = jax.random.normal(kw, (OUT, IN), dtype=jnp.float32) * 0.5
    b = jax.random.normal(kb, (OUT,), dtype=jnp.float32) * 0.1

    wb = init_params(w, b)            # one-time packing, off the hot path
    out = model_forward(x, wb)
    out = jax.block_until_ready(out)

    # Reference check in plain JAX (same semantics as the PyTorch module).
    y_ref = x @ w.T + b                                  # (N, OUT)
    stacked = jnp.stack((y_ref, y_ref, y_ref), axis=2)   # (N, OUT, 3)
    ref = jnp.transpose(stacked, (0, 2, 1))              # (N, 3, OUT)
    assert out.shape == (N, STACK, OUT)
    assert jnp.allclose(out, ref, atol=1e-5, rtol=1e-5)

    print("KERNEL_OK")
</pallas_src>

<mosaic_0001>
module attributes {stable_mosaic.version = 11 : i64} {
  func.func @_linear_kernel(%arg0: memref<4x4xf32, #tpu.memory_space<vmem>>, %arg1: memref<5x3xf32, #tpu.memory_space<vmem>>, %arg2: memref<4x3xf32, #tpu.memory_space<vmem>>) attributes {dimension_semantics = [], scalar_prefetch = 0 : i64, scratch_operands = 0 : i64, tpu.core_type = #tpu.core_type<tc>} {
    %c0 = arith.constant 0 : index
    %c0_0 = arith.constant 0 : index
    %0 = vector.load %arg0[%c0, %c0_0] : memref<4x4xf32, #tpu.memory_space<vmem>>, vector<4x4xf32>
    %c0_1 = arith.constant 0 : index
    %c0_2 = arith.constant 0 : index
    %1 = vector.load %arg1[%c0_1, %c0_2] : memref<5x3xf32, #tpu.memory_space<vmem>>, vector<4x3xf32>
    %c4 = arith.constant 4 : index
    %c0_3 = arith.constant 0 : index
    %2 = vector.load %arg1[%c4, %c0_3] : memref<5x3xf32, #tpu.memory_space<vmem>>, vector<1x3xf32>
    %cst = arith.constant dense<0.000000e+00> : vector<4x3xf32>
    %3 = tpu.matmul %0, %1, %cst {dimension_numbers = #tpu.dot_dimension_numbers<[1], [0], [0], [1], [0, 0, 1, 1], [], []>} : vector<4x4xf32>, vector<4x3xf32>, vector<4x3xf32> -> vector<4x3xf32>
    %4 = vector.broadcast %2 : vector<1x3xf32> to vector<4x3xf32>
    %5 = arith.addf %3, %4 : vector<4x3xf32>
    %c0_4 = arith.constant 0 : index
    %c0_5 = arith.constant 0 : index
    %6 = vector.load %arg2[%c0_4, %c0_5] : memref<4x3xf32, #tpu.memory_space<vmem>>, vector<4x3xf32>
    tpu.vector_store %arg2[%c0_4, %c0_5], %5 {strides = array<i32>} : memref<4x3xf32, #tpu.memory_space<vmem>>, vector<4x3xf32>,
    return
  }
}

</mosaic_0001>

<llo_original>
// kernel: model_forward.1
$region0: #{model_forward.1}
  #allocation0 [shape = 'u32[]', space=smem, size = 0x4, offset = 0x4, fixed_abs, tag = 'smem constant byte address 0x4 - core index']
  #allocation1 [shape = 'u32[72,128]{1,0:T(1,128)}', space=vmem, size = 0x9000, scoped, tag = 'internal scratch']
  %s0 = inlined_call_operand.vmem [shape: f32[4,4], index: 0, kind: input, shape index: {}]
  %s1 = inlined_call_operand.vmem [shape: f32[5,3], index: 1, kind: input, shape index: {}]
  %s2 = inlined_call_operand.vmem [shape: f32[4,3], index: 2, kind: output, shape index: {}]
  %s3 = sld [smem:[#allocation0]]
  $region18: #{model_forward.1} parent=0
    _
  %s5 = ssub.s32 1, %s3
  %s6 = scalar_select 0, %s5, %s3
  // Predicated region
  $region2: #{model_forward.1} parent=0 // pred_check
    _
  $region3: #{model_forward.1} parent=0 // pred_check_branch
    %8 = sbr.rel (0) target = $region5
  $region4: #{model_forward.1} parent=0 // pred_region
    _
  $region5: #{model_forward.1} parent=0 // pred_fallthru
    _
  // Predicated region
  $region6: #{model_forward.1} parent=0 // pred_check
    _
  $region7: #{model_forward.1} parent=0 // pred_check_branch
    %10 = sbr.rel (0) target = $region9
  $region8: #{model_forward.1} parent=0 // pred_region
    _
  $region9: #{model_forward.1} parent=0 // pred_fallthru
    _
  %v11 = vld [vmem:[%s0] sm:$0xf]
  %v12 = vld [vmem:[%s1] sm:$0xf]
  %v13 = vld [vmem:[%s1 + $0x4] sm:$0x1]
  %v14 = vperm.slane %v13, 0
  %vm15 = vcmask 31744
  %v17 = vsel %vm15, %v11, 0
  %vm19 = vcmask 1043456
  %v21 = vsel %vm19, %v12, 0
  %23 = vmatpush.msra.mxu0 0.0
  %24 = vmatpush.msra.mxu0 0.0
  %25 = vmatpush.msra.mxu0 0.0
  %26 = vmatpush.msra.mxu0 0.0
  %27 = vmatpush.msra.mxu0 0.0
  %28 = vmatpush.msra.mxu0 0.0
  %29 = vmatpush.msra.mxu0 0.0
  %30 = vmatpush.msra.mxu0 0.0
  %31 = vmatpush.msra.mxu0 0.0
  %32 = vmatpush.msra.mxu0 0.0
  %33 = vmatpush.msra.mxu0 0.0
  %34 = vmatpush.msra.mxu0 0.0
  %35 = vmatpush.msra.mxu0 0.0
  %36 = vmatpush.msra.mxu0 0.0
  %37 = vmatpush.msra.mxu0 0.0
  %38 = vmatpush.msra.mxu0 %v21
  %39 = vmatmul.f32.gmra.mxu0 %v17
  %v40 = vpop.f32.mrf.mxu0
  %v41 = vadd.f32 %v14, %v40
  %42 = vdwg.mxu0
  %vm43 = vcmask 19456
  %44 = vst.msk [vmem:[%s2] sm:$0xf] %vm43, %v41
  // Predicated region
  $region10: #{model_forward.1} parent=0 // pred_check
    _
  $region11: #{model_forward.1} parent=0 // pred_check_branch
    %46 = sbr.rel (0) target = $region13
  $region12: #{model_forward.1} parent=0 // pred_region
    _
  $region13: #{model_forward.1} parent=0 // pred_fallthru
    _
  // Predicated region
  $region14: #{model_forward.1} parent=0 // pred_check
    _
  $region15: #{model_forward.1} parent=0 // pred_check_branch
    %48 = sbr.rel (0) target = $region17
  $region16: #{model_forward.1} parent=0 // pred_region
    _
  $region17: #{model_forward.1} parent=0 // pred_fallthru
    _

</llo_original>
